<compile_context>
chip_gen: v7x
topology: tpu7x:2x2x1
jax: 0.10.0
libtpu: 0.0.40
codegen_flags: <defaults>
</compile_context>

<pallas_src>
import math

import jax
import jax.numpy as jnp
from jax.experimental import pallas as pl
from jax.experimental.pallas import tpu as pltpu

_MiB = 1024 * 1024


def _vmem_limits():
    """Generation-aware VMEM budgets (128 MiB physical on v5e/v6e, 64 MiB on v7x)."""
    cap = 128 * _MiB
    try:
        cap = int(getattr(pltpu.get_tpu_info(), "vmem_capacity_bytes", cap))
    except Exception:
        pass
    limit = min(int(cap * 0.75), 96 * _MiB)   # 96 MiB on 128-MiB parts, 48 MiB on v7x
    budget = int(limit * 0.85)                # headroom for compiler-internal scratch
    return limit, budget


def _step_vmem_bytes(Hc, Tq, S, D, in_sz, out_sz, has_mask, want_attn):
    """Per-step VMEM estimate: double-buffered blocks + live f32 softmax temporaries."""
    b = 0
    b += 2 * Hc * Tq * D * in_sz              # q block (double buffered)
    b += 2 * 2 * Hc * S * D * in_sz           # k, v blocks (double buffered, resident over qi)
    b += 2 * Hc * Tq * D * out_sz             # o out block
    if want_attn:
        b += 2 * Hc * Tq * S * out_sz         # attn out block
    if has_mask:
        b += 2 * Tq * S                       # int8 mask block
    b += 3 * Hc * Tq * S * 4                  # live f32 temps in softmax (s, e, p)
    return b


def _choose_tiles(H, S, D, in_sz, out_sz, has_mask, want_attn, budget):
    """Pick (heads-per-step, query-tile) that fills the MXU M dim and fits VMEM."""
    max_hc = max(1, 128 // D) if D < 128 else 1
    hcs = [c for c in range(min(max_hc, H), 0, -1) if H % c == 0]
    tqs = sorted({min(t, S) for t in (512, 256, 128, 64, 32, 16, 8)}, reverse=True)
    best = None
    for hc in hcs:
        for tq in tqs:
            if _step_vmem_bytes(hc, tq, S, D, in_sz, out_sz, has_mask, want_attn) > budget:
                continue
            # fill the (<=256-row) MXU M dim first, then maximize per-step work, then Tq
            score = (min(tq, 256), hc * tq, tq)
            if best is None or score > best[0]:
                best = (score, hc, tq)
    if best is None:                          # nothing fits the model; smallest legal tile
        return 1, min(8, S)
    return best[1], best[2]


def _make_kernel(inv_sqrt_scale, has_mask, want_attn, mxu_dtype):
    def kernel(*refs):
        i = 0
        mask_ref = None
        if has_mask:
            mask_ref = refs[i]
            i += 1
        q_ref, k_ref, v_ref = refs[i], refs[i + 1], refs[i + 2]
        i += 3
        o_ref = refs[i]
        i += 1
        a_ref = refs[i] if want_attn else None

        q = q_ref[0]                                   # (Hc, Tq, D)
        k = k_ref[0]                                   # (Hc, S,  D)
        v = v_ref[0]                                   # (Hc, S,  D)
        if mxu_dtype is not None:
            q = q.astype(mxu_dtype)
            k = k.astype(mxu_dtype)

        # QK^T contracting over D, batched over the packed heads; f32 MXU accumulation.
        s = jnp.einsum("hqd,hkd->hqk", q, k, preferred_element_type=jnp.float32)
        s = s * jnp.float32(inv_sqrt_scale)            # scale scores in f32 (torch parity)

        if has_mask:
            msk = mask_ref[0]                          # (Tq, S) int8; 0 => masked
            s = jnp.where(msk[None, :, :] == 0, jnp.float32(-1e9), s)

        # Row-wise numerically stable softmax; one reciprocal per row.
        m = jnp.max(s, axis=-1, keepdims=True)
        e = jnp.exp(s - m)
        inv = pl.reciprocal(jnp.sum(e, axis=-1, keepdims=True), approx=False)
        p = e * inv                                    # (Hc, Tq, S) f32

        if want_attn:
            a_ref[0] = p.astype(a_ref.dtype)

        pv_dtype = v.dtype if mxu_dtype is None else mxu_dtype
        o_ref[0] = jnp.einsum("hqk,hkd->hqd",
                              p.astype(pv_dtype), v.astype(pv_dtype),
                              preferred_element_type=jnp.float32).astype(o_ref.dtype)

    return kernel


def scaled_dot_product_attention(q, k, v, scale, mask=None, *, q_tile=None,
                                 heads_per_step=None, return_attn=True,
                                 mxu_dtype=None):
    """Pallas implementation of ScaledDotProductAttention.forward.

    q, k, v: [B, H, S, D] arrays.  mask: optional [B, S, S] (0 => masked).
    Returns (out [B, H, S, D], attn [B, H, S, S]); just `out` if return_attn=False.
    """
    B, H, S, D = q.shape
    inv_sqrt_scale = 1.0 / math.sqrt(scale)
    has_mask = mask is not None

    vmem_limit, budget = _vmem_limits()
    in_sz = q.dtype.itemsize
    out_sz = q.dtype.itemsize
    Hc, Tq = _choose_tiles(H, S, D, in_sz, out_sz, has_mask, return_attn, budget)
    if heads_per_step is not None:
        Hc = heads_per_step
    if q_tile is not None:
        Tq = q_tile
    assert H % Hc == 0, "heads_per_step must divide the number of heads"

    grid = (B, H // Hc, pl.cdiv(S, Tq))

    q_spec = pl.BlockSpec((1, Hc, Tq, D), lambda b, hg, qi: (b, hg, qi, 0))
    kv_spec = pl.BlockSpec((1, Hc, S, D), lambda b, hg, qi: (b, hg, 0, 0))  # resident over qi
    o_spec = pl.BlockSpec((1, Hc, Tq, D), lambda b, hg, qi: (b, hg, qi, 0))
    a_spec = pl.BlockSpec((1, Hc, Tq, S), lambda b, hg, qi: (b, hg, qi, 0))

    in_specs = [q_spec, kv_spec, kv_spec]
    args = [q, k, v]
    if has_mask:
        mask_i8 = (mask != 0).astype(jnp.int8)         # 4x less mask DMA than int32
        in_specs = [pl.BlockSpec((1, Tq, S), lambda b, hg, qi: (b, qi, 0))] + in_specs
        args = [mask_i8] + args

    if return_attn:
        out_shape = (jax.ShapeDtypeStruct((B, H, S, D), q.dtype),
                     jax.ShapeDtypeStruct((B, H, S, S), q.dtype))
        out_specs = (o_spec, a_spec)
    else:
        out_shape = jax.ShapeDtypeStruct((B, H, S, D), q.dtype)
        out_specs = o_spec

    kernel = _make_kernel(inv_sqrt_scale, has_mask, return_attn, mxu_dtype)
    cparams = pltpu.CompilerParams(
        # no cross-qi carry -> all axes parallel (lets v7x's 2 TCs split over qi too)
        dimension_semantics=("parallel", "parallel", "parallel"),
        vmem_limit_bytes=vmem_limit,
    )
    return pl.pallas_call(
        kernel,
        out_shape=out_shape,
        grid=grid,
        in_specs=in_specs,
        out_specs=out_specs,
        compiler_params=cparams,
    )(*args)


def _reference(q, k, v, scale, mask=None):
    attn = jnp.einsum("bhqd,bhkd->bhqk", q, k) / math.sqrt(scale)
    if mask is not None:
        attn = jnp.where(mask[:, None, :, :] == 0, -1e9, attn)
    attn = jax.nn.softmax(attn, axis=-1)
    out = jnp.einsum("bhqk,bhkd->bhqd", attn, v)
    return out, attn


if __name__ == "__main__":
    # Small shapes consistent with the module: B=2, H=2, S=8, D=32.
    B, H, S, D = 2, 2, 8, 32
    scale = D

    key = jax.random.PRNGKey(0)
    kq, kk, kv_, km = jax.random.split(key, 4)
    q = jax.random.normal(kq, (B, H, S, D), dtype=jnp.float32)
    k = jax.random.normal(kk, (B, H, S, D), dtype=jnp.float32)
    v = jax.random.normal(kv_, (B, H, S, D), dtype=jnp.float32)
    mask = (jax.random.uniform(km, (B, S, S)) > 0.3).astype(jnp.int32)

    # no-mask path
    out, attn = scaled_dot_product_attention(q, k, v, scale, mask=None)
    jax.block_until_ready((out, attn))
    ref_out, ref_attn = _reference(q, k, v, scale, mask=None)
    assert jnp.allclose(out, ref_out, atol=1e-5), "output mismatch (no mask)"
    assert jnp.allclose(attn, ref_attn, atol=1e-5), "attn mismatch (no mask)"

    # masked path
    out_m, attn_m = scaled_dot_product_attention(q, k, v, scale, mask=mask)
    jax.block_until_ready((out_m, attn_m))
    ref_out_m, ref_attn_m = _reference(q, k, v, scale, mask=mask)
    assert jnp.allclose(out_m, ref_out_m, atol=1e-5), "output mismatch (mask)"
    assert jnp.allclose(attn_m, ref_attn_m, atol=1e-5), "attn mismatch (mask)"

    # exercise the q-tiled + head-packed path (Hc=4, Tq<S) on a modest shape
    B2, H2, S2, D2 = 1, 4, 256, 32
    k2q, k2k, k2v, k2m = jax.random.split(jax.random.PRNGKey(0), 4)
    q2 = jax.random.normal(k2q, (B2, H2, S2, D2), dtype=jnp.float32)
    k2 = jax.random.normal(k2k, (B2, H2, S2, D2), dtype=jnp.float32)
    v2 = jax.random.normal(k2v, (B2, H2, S2, D2), dtype=jnp.float32)
    m2 = (jax.random.uniform(k2m, (B2, S2, S2)) > 0.3).astype(jnp.int32)
    out2, attn2 = scaled_dot_product_attention(q2, k2, v2, D2, mask=m2, q_tile=64)
    jax.block_until_ready((out2, attn2))
    ref_out2, ref_attn2 = _reference(q2, k2, v2, D2, mask=m2)
    assert jnp.allclose(out2, ref_out2, atol=1e-4), "output mismatch (tiled, mask)"
    assert jnp.allclose(attn2, ref_attn2, atol=1e-5), "attn mismatch (tiled, mask)"

    # no-attn-output variant (drops the dominant (B,H,S,S) writeback)
    out3 = scaled_dot_product_attention(q2, k2, v2, D2, mask=m2, q_tile=64,
                                        return_attn=False)
    jax.block_until_ready(out3)
    assert jnp.allclose(out3, ref_out2, atol=1e-4), "output mismatch (no-attn variant)"

    print("KERNEL_OK")
</pallas_src>

<mosaic_0001>
module attributes {stable_mosaic.version = 11 : i64} {
  func.func @kernel(%arg0: i32, %arg1: i32, %arg2: i32, %arg3: memref<1x2x8x32xf32, #tpu.memory_space<vmem>>, %arg4: memref<1x2x8x32xf32, #tpu.memory_space<vmem>>, %arg5: memref<1x2x8x32xf32, #tpu.memory_space<vmem>>, %arg6: memref<1x2x8x32xf32, #tpu.memory_space<vmem>>, %arg7: memref<1x2x8x8xf32, #tpu.memory_space<vmem>>) attributes {dimension_semantics = [#tpu.dimension_semantics<parallel>, #tpu.dimension_semantics<parallel>, #tpu.dimension_semantics<parallel>], iteration_bounds = array<i64: 2, 1, 1>, scalar_prefetch = 0 : i64, scratch_operands = 0 : i64, tpu.core_type = #tpu.core_type<tc>, window_params = [{transform_indices = @transform_0, window_bounds = array<i64: 1, 2, 8, 32>}, {transform_indices = @transform_1, window_bounds = array<i64: 1, 2, 8, 32>}, {transform_indices = @transform_2, window_bounds = array<i64: 1, 2, 8, 32>}, {transform_indices = @transform_3, window_bounds = array<i64: 1, 2, 8, 32>}, {transform_indices = @transform_4, window_bounds = array<i64: 1, 2, 8, 8>}]} {
    %c0 = arith.constant 0 : index
    %c0_0 = arith.constant 0 : index
    %c0_1 = arith.constant 0 : index
    %c0_2 = arith.constant 0 : index
    %0 = vector.load %arg3[%c0, %c0_0, %c0_1, %c0_2] : memref<1x2x8x32xf32, #tpu.memory_space<vmem>>, vector<1x2x8x32xf32>
    %1 = vector.shape_cast %0 : vector<1x2x8x32xf32> to vector<2x8x32xf32>
    %c0_3 = arith.constant 0 : index
    %c0_4 = arith.constant 0 : index
    %c0_5 = arith.constant 0 : index
    %c0_6 = arith.constant 0 : index
    %2 = vector.load %arg4[%c0_3, %c0_4, %c0_5, %c0_6] : memref<1x2x8x32xf32, #tpu.memory_space<vmem>>, vector<1x2x8x32xf32>
    %3 = vector.shape_cast %2 : vector<1x2x8x32xf32> to vector<2x8x32xf32>
    %c0_7 = arith.constant 0 : index
    %c0_8 = arith.constant 0 : index
    %c0_9 = arith.constant 0 : index
    %c0_10 = arith.constant 0 : index
    %4 = vector.load %arg5[%c0_7, %c0_8, %c0_9, %c0_10] : memref<1x2x8x32xf32, #tpu.memory_space<vmem>>, vector<1x2x8x32xf32>
    %5 = vector.shape_cast %4 : vector<1x2x8x32xf32> to vector<2x8x32xf32>
    "tpu.trace_start"() <{level = 10 : i32, message = "hqd,hkd->hqk"}> : () -> ()
    %cst = arith.constant dense<0.000000e+00> : vector<2x8x8xf32>
    %6 = tpu.matmul %1, %3, %cst {dimension_numbers = #tpu.dot_dimension_numbers<[2], [2], [1], [1], [0, 0, 0, 1, 1, 1], [0], [0]>} : vector<2x8x32xf32>, vector<2x8x32xf32>, vector<2x8x8xf32> -> vector<2x8x8xf32>
    "tpu.trace_stop"() : () -> ()
    %cst_11 = arith.constant 0.176776692 : f32
    %7 = vector.broadcast %cst_11 : f32 to vector<2x8x8xf32>
    %8 = arith.mulf %6, %7 : vector<2x8x8xf32>
    %cst_12 = arith.constant dense<0xFF800000> : vector<2x8xf32>
    %9 = vector.multi_reduction <maximumf>, %8, %cst_12 [2] : vector<2x8x8xf32> to vector<2x8xf32>
    %10 = vector.shape_cast %9 : vector<2x8xf32> to vector<2x8x1xf32>
    %11 = vector.broadcast %10 : vector<2x8x1xf32> to vector<2x8x8xf32>
    %12 = arith.subf %8, %11 : vector<2x8x8xf32>
    %13 = math.exp %12 : vector<2x8x8xf32>
    %cst_13 = arith.constant dense<0.000000e+00> : vector<2x8xf32>
    %14 = vector.multi_reduction <add>, %13, %cst_13 [2] : vector<2x8x8xf32> to vector<2x8xf32>
    %15 = vector.shape_cast %14 : vector<2x8xf32> to vector<2x8x1xf32>
    %16 = tpu.reciprocal %15 : vector<2x8x1xf32> -> vector<2x8x1xf32>
    %17 = vector.broadcast %16 : vector<2x8x1xf32> to vector<2x8x8xf32>
    %18 = arith.mulf %13, %17 : vector<2x8x8xf32>
    %c0_14 = arith.constant 0 : index
    %c0_15 = arith.constant 0 : index
    %c0_16 = arith.constant 0 : index
    %c0_17 = arith.constant 0 : index
    %19 = vector.load %arg7[%c0_14, %c0_15, %c0_16, %c0_17] : memref<1x2x8x8xf32, #tpu.memory_space<vmem>>, vector<1x2x8x8xf32>
    %20 = vector.shape_cast %19 : vector<1x2x8x8xf32> to vector<2x8x8xf32>
    %21 = vector.shape_cast %18 : vector<2x8x8xf32> to vector<1x2x8x8xf32>
    tpu.vector_store %arg7[%c0_14, %c0_15, %c0_16, %c0_17], %21 {strides = array<i32>} : memref<1x2x8x8xf32, #tpu.memory_space<vmem>>, vector<1x2x8x8xf32>,
    "tpu.trace_start"() <{level = 10 : i32, message = "hqk,hkd->hqd"}> : () -> ()
    %cst_18 = arith.constant dense<0.000000e+00> : vector<2x8x32xf32>
    %22 = tpu.matmul %18, %5, %cst_18 {dimension_numbers = #tpu.dot_dimension_numbers<[2], [1], [1], [2], [0, 0, 0, 1, 1, 2], [0], [0]>} : vector<2x8x8xf32>, vector<2x8x32xf32>, vector<2x8x32xf32> -> vector<2x8x32xf32>
    "tpu.trace_stop"() : () -> ()
    %c0_19 = arith.constant 0 : index
    %c0_20 = arith.constant 0 : index
    %c0_21 = arith.constant 0 : index
    %c0_22 = arith.constant 0 : index
    %23 = vector.load %arg6[%c0_19, %c0_20, %c0_21, %c0_22] : memref<1x2x8x32xf32, #tpu.memory_space<vmem>>, vector<1x2x8x32xf32>
    %24 = vector.shape_cast %23 : vector<1x2x8x32xf32> to vector<2x8x32xf32>
    %25 = vector.shape_cast %22 : vector<2x8x32xf32> to vector<1x2x8x32xf32>
    tpu.vector_store %arg6[%c0_19, %c0_20, %c0_21, %c0_22], %25 {strides = array<i32>} : memref<1x2x8x32xf32, #tpu.memory_space<vmem>>, vector<1x2x8x32xf32>,
    return
  }
  func.func @transform_0(%arg0: i32, %arg1: i32, %arg2: i32) -> (i32, i32, i32, i32) {
    %c0_i32 = arith.constant 0 : i32
    %c0_i32_0 = arith.constant 0 : i32
    return %arg0, %arg1, %arg2, %c0_i32 : i32, i32, i32, i32
  }
  func.func @transform_1(%arg0: i32, %arg1: i32, %arg2: i32) -> (i32, i32, i32, i32) {
    %c0_i32 = arith.constant 0 : i32
    %c0_i32_0 = arith.constant 0 : i32
    %c0_i32_1 = arith.constant 0 : i32
    return %arg0, %arg1, %c0_i32, %c0_i32_0 : i32, i32, i32, i32
  }
  func.func @transform_2(%arg0: i32, %arg1: i32, %arg2: i32) -> (i32, i32, i32, i32) {
    %c0_i32 = arith.constant 0 : i32
    %c0_i32_0 = arith.constant 0 : i32
    %c0_i32_1 = arith.constant 0 : i32
    return %arg0, %arg1, %c0_i32, %c0_i32_0 : i32, i32, i32, i32
  }
  func.func @transform_3(%arg0: i32, %arg1: i32, %arg2: i32) -> (i32, i32, i32, i32) {
    %c0_i32 = arith.constant 0 : i32
    %c0_i32_0 = arith.constant 0 : i32
    return %arg0, %arg1, %arg2, %c0_i32 : i32, i32, i32, i32
  }
  func.func @transform_4(%arg0: i32, %arg1: i32, %arg2: i32) -> (i32, i32, i32, i32) {
    %c0_i32 = arith.constant 0 : i32
    %c0_i32_0 = arith.constant 0 : i32
    return %arg0, %arg1, %arg2, %c0_i32 : i32, i32, i32, i32
  }
}

</mosaic_0001>

<llo_original>
// kernel: tpu_custom_call.1
$region0: #{tpu_custom_call.1}
  #allocation0 [shape = 'u32[]', space=smem, size = 0x4, offset = 0x4, fixed_abs, tag = 'smem constant byte address 0x4 - core index']
  #allocation1 [shape = 'u32[144,128]{1,0:T(1,128)}', space=vmem, size = 0x12000, scoped, tag = 'internal scratch']
  %s0 = inlined_call_operand.hbm [shape: f32[2,2,8,32], index: 0, kind: input, shape index: {}]
  %s1 = inlined_call_operand.hbm [shape: f32[2,2,8,32], index: 1, kind: input, shape index: {}]
  %s2 = inlined_call_operand.hbm [shape: f32[2,2,8,32], index: 2, kind: input, shape index: {}]
  %s3 = inlined_call_operand.hbm [shape: f32[2,2,8,32], index: 3, kind: output, shape index: {0}]
  %s4 = inlined_call_operand.hbm [shape: f32[2,2,8,8], index: 4, kind: output, shape index: {1}]
  %5 = xla_tuple %s3, %s4
  %s6 = sld [smem:[#allocation0]]
  $region65: #{tpu_custom_call.1} parent=0
    _
  %s8 = ssub.s32 1, %s6
  %s9 = scalar_select 0, %s8, %s6
  $region1: #{tpu_custom_call.1} parent=0
    #allocation2 [shape = 'u8[16384]{0}', space=vmem, size = 0x4000, scoped, tag = 'input window, operand 0']
    #allocation3 [shape = 's32[2]{0}', space=sflag, size = 0x8, scoped, tag = 'scoped memory for tpu_custom_call.1']
    #allocation4 [shape = 's32[2]{0}', space=sflag, size = 0x8, scoped, tag = 'scoped memory for tpu_custom_call.1']
    #allocation5 [shape = 'u8[16384]{0}', space=vmem, size = 0x4000, scoped, tag = 'input window, operand 1']
    #allocation6 [shape = 's32[2]{0}', space=sflag, size = 0x8, scoped, tag = 'scoped memory for tpu_custom_call.1']
    #allocation7 [shape = 'u8[16384]{0}', space=vmem, size = 0x4000, scoped, tag = 'input window, operand 2']
    #allocation8 [shape = 'u8[16384]{0}', space=vmem, size = 0x4000, scoped, tag = 'output window, operand 0']
    #allocation9 [shape = 'u8[16384]{0}', space=vmem, size = 0x4000, scoped, tag = 'output window, operand 1']
    #allocation10 [shape = 's32[2]{0}', space=sflag, size = 0x8, scoped, tag = 'scoped memory for tpu_custom_call.1']
    %10 = vsyncpa [#allocation3], 0
    %s11 = scalar_lea.sflag [#allocation3], 1
    %12 = vsyncpa %s11, 0
    %13 = vsyncpa [#allocation6], 0
    %s14 = scalar_lea.sflag [#allocation6], 1
    %15 = vsyncpa %s14, 0
    %16 = vsyncpa [#allocation4], 0
    %s17 = scalar_lea.sflag [#allocation4], 1
    %18 = vsyncpa %s17, 0
    %19 = vsyncpa [#allocation10], 0
    %s20 = scalar_lea.sflag [#allocation10], 1
    %21 = vsyncpa %s20, 0
    loop: start=0, step=1, limit=4
    $region2: #{tpu_custom_call.1} parent=1 // loop_pre_header
      _
    $region3: #{tpu_custom_call.1} parent=1 // loop_header
      %s23 = sphi 0, %s27
      %p24 = scmp.ge.s32.totalorder %s23, 4
      %s30 = sphi 0, %s49
      %s31 = sphi 0, %s45
      %s32 = sphi 0, %s41
      %s33 = sphi 0, %s30
      %s34 = sphi 0, %s31
      %s35 = sphi 0, %s32
      %s36 = sphi 0, %s33
      %s37 = sphi 0, %s34
      %s38 = sphi 0, %s35
      %s56 = sphi 0, %s58
      %s59 = sphi 0, %s56
      %s60 = sphi 0, %s59
      %s76 = sphi 0, %s60
      %s84 = sphi 0, %s86
      %s87 = sphi 0, %s84
      %s88 = sphi 0, %s87
      %s104 = sphi 0, %s88
      %s112 = sphi 0, %s114
      %s115 = sphi 0, %s112
      %s116 = sphi 0, %s115
      %s132 = sphi 0, %s116
      %s142 = sphi 0, %s144
      %s145 = sphi 0, %s142
      %s146 = sphi 0, %s145
      %s162 = sphi 0, %s146
      %s172 = sphi 0, %s174
      %s175 = sphi 0, %s172
      %s176 = sphi 0, %s175
      %s192 = sphi 0, %s176
    $region4: #{tpu_custom_call.1} parent=1 // loop_header_branch
      %26 = sbr.rel (%p24) target = $region8
    $region5: #{tpu_custom_call.1} parent=1 // loop_body
      %s28 = ssub.s32 %s23, 1
      %s29 = ssub.s32 %s23, 2
      %s39 = sadd.s32 1, %s32
      %p40 = scmp.ge.s32.totalorder %s39, 1
      %s41 = scalar_select %p40, 0, %s39
      %s42 = sadd.s32 1, %s31
      %s43 = scalar_select %p40, %s42, %s31
      %p44 = scmp.ge.s32.totalorder %s43, 1
      %s45 = scalar_select %p44, 0, %s43
      %s46 = sadd.s32 1, %s30
      %s47 = scalar_select %p44, %s46, %s30
      %p48 = scmp.ge.s32.totalorder %s47, 2
      %s49 = scalar_select %p48, 0, %s47
      %s50 = ssub.s32 %s30, %s49
      %s51 = ssub.s32 %s31, %s45
      %s52 = sor.u32 %s50, %s51
      %s53 = ssub.s32 %s32, %s41
      %s54 = sor.u32 %s52, %s53
      %p55 = scmp.eq.s32.totalorder %s54, 0
      %s57 = sadd.s32 %s56, 1
      %s58 = scalar_select %p55, %s56, %s57
      %p61 = pneg %p55
      %p62 = scmp.eq.s32.totalorder %s23, 1
      %p63 = por %p61, %p62
      %p64 = scmp.ne.s32.totalorder %s56, %s59
      %p65 = scmp.eq.s32.totalorder %s23, 0
      %p66 = por %p64, %p65
      %p67 = scmp.ne.s32.totalorder %s56, %s59
      %p68 = scmp.eq.s32.totalorder %s28, 1
      %p69 = por %p67, %p68
      %p70 = scmp.ne.s32.totalorder %s59, %s60
      %p71 = scmp.eq.s32.totalorder %s28, 0
      %p72 = por %p70, %p71
      %p73 = scmp.ne.s32.totalorder %s59, %s60
      %p74 = scmp.eq.s32.totalorder %s29, 1
      %p75 = por %p73, %p74
      %p77 = scmp.ne.s32.totalorder %s60, %s76
      %p78 = scmp.eq.s32.totalorder %s29, 0
      %p79 = por %p77, %p78
      %s80 = ssub.s32 %s30, %s49
      %s81 = ssub.s32 %s31, %s45
      %s82 = sor.u32 %s80, %s81
      %p83 = scmp.eq.s32.totalorder %s82, 0
      %s85 = sadd.s32 %s84, 1
      %s86 = scalar_select %p83, %s84, %s85
      %p89 = pneg %p83
      %p90 = scmp.eq.s32.totalorder %s23, 1
      %p91 = por %p89, %p90
      %p92 = scmp.ne.s32.totalorder %s84, %s87
      %p93 = scmp.eq.s32.totalorder %s23, 0
      %p94 = por %p92, %p93
      %p95 = scmp.ne.s32.totalorder %s84, %s87
      %p96 = scmp.eq.s32.totalorder %s28, 1
      %p97 = por %p95, %p96
      %p98 = scmp.ne.s32.totalorder %s87, %s88
      %p99 = scmp.eq.s32.totalorder %s28, 0
      %p100 = por %p98, %p99
      %p101 = scmp.ne.s32.totalorder %s87, %s88
      %p102 = scmp.eq.s32.totalorder %s29, 1
      %p103 = por %p101, %p102
      %p105 = scmp.ne.s32.totalorder %s88, %s104
      %p106 = scmp.eq.s32.totalorder %s29, 0
      %p107 = por %p105, %p106
      %s108 = ssub.s32 %s30, %s49
      %s109 = ssub.s32 %s31, %s45
      %s110 = sor.u32 %s108, %s109
      %p111 = scmp.eq.s32.totalorder %s110, 0
      %s113 = sadd.s32 %s112, 1
      %s114 = scalar_select %p111, %s112, %s113
      %p117 = pneg %p111
      %p118 = scmp.eq.s32.totalorder %s23, 1
      %p119 = por %p117, %p118
      %p120 = scmp.ne.s32.totalorder %s112, %s115
      %p121 = scmp.eq.s32.totalorder %s23, 0
      %p122 = por %p120, %p121
      %p123 = scmp.ne.s32.totalorder %s112, %s115
      %p124 = scmp.eq.s32.totalorder %s28, 1
      %p125 = por %p123, %p124
      %p126 = scmp.ne.s32.totalorder %s115, %s116
      %p127 = scmp.eq.s32.totalorder %s28, 0
      %p128 = por %p126, %p127
      %p129 = scmp.ne.s32.totalorder %s115, %s116
      %p130 = scmp.eq.s32.totalorder %s29, 1
      %p131 = por %p129, %p130
      %p133 = scmp.ne.s32.totalorder %s116, %s132
      %p134 = scmp.eq.s32.totalorder %s29, 0
      %p135 = por %p133, %p134
      %s136 = ssub.s32 %s30, %s49
      %s137 = ssub.s32 %s31, %s45
      %s138 = sor.u32 %s136, %s137
      %s139 = ssub.s32 %s32, %s41
      %s140 = sor.u32 %s138, %s139
      %p141 = scmp.eq.s32.totalorder %s140, 0
      %s143 = sadd.s32 %s142, 1
      %s144 = scalar_select %p141, %s142, %s143
      %p147 = pneg %p141
      %p148 = scmp.eq.s32.totalorder %s23, 1
      %p149 = por %p147, %p148
      %p150 = scmp.ne.s32.totalorder %s142, %s145
      %p151 = scmp.eq.s32.totalorder %s23, 0
      %p152 = por %p150, %p151
      %p153 = scmp.ne.s32.totalorder %s142, %s145
      %p154 = scmp.eq.s32.totalorder %s28, 1
      %p155 = por %p153, %p154
      %p156 = scmp.ne.s32.totalorder %s145, %s146
      %p157 = scmp.eq.s32.totalorder %s28, 0
      %p158 = por %p156, %p157
      %p159 = scmp.ne.s32.totalorder %s145, %s146
      %p160 = scmp.eq.s32.totalorder %s29, 1
      %p161 = por %p159, %p160
      %p163 = scmp.ne.s32.totalorder %s146, %s162
      %p164 = scmp.eq.s32.totalorder %s29, 0
      %p165 = por %p163, %p164
      %s166 = ssub.s32 %s30, %s49
      %s167 = ssub.s32 %s31, %s45
      %s168 = sor.u32 %s166, %s167
      %s169 = ssub.s32 %s32, %s41
      %s170 = sor.u32 %s168, %s169
      %p171 = scmp.eq.s32.totalorder %s170, 0
      %s173 = sadd.s32 %s172, 1
      %s174 = scalar_select %p171, %s172, %s173
      %p177 = pneg %p171
      %p178 = scmp.eq.s32.totalorder %s23, 1
      %p179 = por %p177, %p178
      %p180 = scmp.ne.s32.totalorder %s172, %s175
      %p181 = scmp.eq.s32.totalorder %s23, 0
      %p182 = por %p180, %p181
      %p183 = scmp.ne.s32.totalorder %s172, %s175
      %p184 = scmp.eq.s32.totalorder %s28, 1
      %p185 = por %p183, %p184
      %p186 = scmp.ne.s32.totalorder %s175, %s176
      %p187 = scmp.eq.s32.totalorder %s28, 0
      %p188 = por %p186, %p187
      %p189 = scmp.ne.s32.totalorder %s175, %s176
      %p190 = scmp.eq.s32.totalorder %s29, 1
      %p191 = por %p189, %p190
      %p193 = scmp.ne.s32.totalorder %s176, %s192
      %p194 = scmp.eq.s32.totalorder %s29, 0
      %p195 = por %p193, %p194
      %p196 = scmp.le.s32.totalorder 1, %s23
      %p197 = scmp.lt.s32.totalorder %s23, 3
      %p198 = pnand %p196, %p197
      %p199 = pneg %p198
      // Predicated region
      $region9: #{tpu_custom_call.1} parent=5 // pred_check
        _
      $region10: #{tpu_custom_call.1} parent=5 // pred_check_branch
        %201 = sbr.rel (%p198) target = $region12
      $region11: #{tpu_custom_call.1} parent=5 // pred_region
        %s202 = ssub.s32 %s23, 1
      $region12: #{tpu_custom_call.1} parent=5 // pred_fallthru
        _
      %p203 = scmp.lt.s32.totalorder %s23, 2
      // Predicated region
      $region13: #{tpu_custom_call.1} parent=5 // pred_check
        %p204 = pneg %p203
      $region14: #{tpu_custom_call.1} parent=5 // pred_check_branch
        %206 = sbr.rel (%p204) target = $region16
      $region15: #{tpu_custom_call.1} parent=5 // pred_region
        // Predicated region
        $region17: #{tpu_custom_call.1} parent=15 // pred_check
          %p207 = pneg %p66
        $region18: #{tpu_custom_call.1} parent=15 // pred_check_branch
          %209 = sbr.rel (%p207) target = $region20
        $region19: #{tpu_custom_call.1} parent=15 // pred_region
          %s210 = sand.u32 %s56, 1
          %s211 = scalar_lea.sflag [#allocation3], %s210
          %s212 = sand.u32 %s56, 1
          %s213 = smul.addr %s212, 16
          %s214 = scalar_lea.vmem [#allocation2], %s213
          %s215 = smul.u32 2, %s31
          %s217 = ssub.s32 256, 256
          %218 = vsyncadd %s211, %s217
          %s219 = sadd.s32 %s32, %s215
          %s220 = smul.addr %s30, 2
          %s221 = sadd.s32 %s219, %s220
          %s222 = smul.addr %s221, 128
          %s223 = scalar_lea.hbm %s0, %s222
          %s224 = sshll.u32 %s214, 4
          %s225 = int_to_ptr.vmem [resolvable:$true] %s224
          %230 = dma.hbm_to_vmem [thread:$0]  %s223, 256, %s225, %s211, 128, 128, 8
        $region20: #{tpu_custom_call.1} parent=15 // pred_fallthru
          _
        // Predicated region
        $region21: #{tpu_custom_call.1} parent=15 // pred_check
          %p231 = pneg %p94
        $region22: #{tpu_custom_call.1} parent=15 // pred_check_branch
          %233 = sbr.rel (%p231) target = $region24
        $region23: #{tpu_custom_call.1} parent=15 // pred_region
          %s234 = sand.u32 %s23, 1
          %s235 = scalar_lea.sflag [#allocation6], %s234
          %s236 = sand.u32 %s84, 1
          %s237 = smul.addr %s236, 16
          %s238 = scalar_lea.vmem [#allocation5], %s237
          %s239 = smul.u32 2, %s31
          %s241 = ssub.s32 256, 256
          %242 = vsyncadd %s235, %s241
          %s243 = smul.addr %s30, 2
          %s244 = sadd.s32 %s239, %s243
          %s245 = smul.addr %s244, 128
          %s246 = scalar_lea.hbm %s1, %s245
          %s247 = sshll.u32 %s238, 4
          %s248 = int_to_ptr.vmem [resolvable:$true] %s247
          %253 = dma.hbm_to_vmem [thread:$0]  %s246, 256, %s248, %s235, 128, 128, 8
        $region24: #{tpu_custom_call.1} parent=15 // pred_fallthru
          _
        // Predicated region
        $region25: #{tpu_custom_call.1} parent=15 // pred_check
          %p254 = pneg %p122
        $region26: #{tpu_custom_call.1} parent=15 // pred_check_branch
          %256 = sbr.rel (%p254) target = $region28
        $region27: #{tpu_custom_call.1} parent=15 // pred_region
          %s257 = sand.u32 %s23, 1
          %s258 = scalar_lea.sflag [#allocation6], %s257
          %s259 = sand.u32 %s112, 1
          %s260 = smul.addr %s259, 16
          %s261 = scalar_lea.vmem [#allocation7], %s260
          %s262 = smul.u32 2, %s31
          %s264 = ssub.s32 256, 256
          %265 = vsyncadd %s258, %s264
          %s266 = smul.addr %s30, 2
          %s267 = sadd.s32 %s262, %s266
          %s268 = smul.addr %s267, 128
          %s269 = scalar_lea.hbm %s2, %s268
          %s270 = sshll.u32 %s261, 4
          %s271 = int_to_ptr.vmem [resolvable:$true] %s270
          %276 = dma.hbm_to_vmem [thread:$0]  %s269, 256, %s271, %s258, 128, 128, 8
        $region28: #{tpu_custom_call.1} parent=15 // pred_fallthru
          _
      $region16: #{tpu_custom_call.1} parent=5 // pred_fallthru
        _
      %p277 = scmp.le.s32.totalorder 1, %s23
      %p278 = scmp.lt.s32.totalorder %s23, 3
      %p279 = pnand %p277, %p278
      %p280 = pneg %p279
      // Predicated region
      $region29: #{tpu_custom_call.1} parent=5 // pred_check
        _
      $region30: #{tpu_custom_call.1} parent=5 // pred_check_branch
        %282 = sbr.rel (%p279) target = $region32
      $region31: #{tpu_custom_call.1} parent=5 // pred_region
        %s283 = ssub.s32 %s23, 1
        %s284 = sand.u32 %s59, 1
        %s285 = scalar_lea.sflag [#allocation3], %s284
        %s286 = sand.u32 %s59, 1
        %s287 = smul.addr %s286, 16
        %s288 = scalar_lea.vmem [#allocation2], %s287
        // Predicated region
        $region33: #{tpu_custom_call.1} parent=31 // pred_check
          %p289 = pneg %p72
        $region34: #{tpu_custom_call.1} parent=31 // pred_check_branch
          %291 = sbr.rel (%p289) target = $region36
        $region35: #{tpu_custom_call.1} parent=31 // pred_region
          %292 = dma.done %s285, 256
        $region36: #{tpu_custom_call.1} parent=31 // pred_fallthru
          _
        %s293 = sand.u32 %s28, 1
        %s294 = scalar_lea.sflag [#allocation6], %s293
        %s295 = sand.u32 %s87, 1
        %s296 = smul.addr %s295, 16
        %s297 = scalar_lea.vmem [#allocation5], %s296
        // Predicated region
        $region37: #{tpu_custom_call.1} parent=31 // pred_check
          %p298 = pneg %p100
        $region38: #{tpu_custom_call.1} parent=31 // pred_check_branch
          %300 = sbr.rel (%p298) target = $region40
        $region39: #{tpu_custom_call.1} parent=31 // pred_region
          %301 = dma.done %s294, 256
        $region40: #{tpu_custom_call.1} parent=31 // pred_fallthru
          _
        %s302 = sand.u32 %s28, 1
        %s303 = scalar_lea.sflag [#allocation6], %s302
        %s304 = sand.u32 %s115, 1
        %s305 = smul.addr %s304, 16
        %s306 = scalar_lea.vmem [#allocation7], %s305
        // Predicated region
        $region41: #{tpu_custom_call.1} parent=31 // pred_check
          %p307 = pneg %p128
        $region42: #{tpu_custom_call.1} parent=31 // pred_check_branch
          %309 = sbr.rel (%p307) target = $region44
        $region43: #{tpu_custom_call.1} parent=31 // pred_region
          %310 = dma.done %s303, 256
        $region44: #{tpu_custom_call.1} parent=31 // pred_fallthru
          _
        %s311 = sand.u32 %s59, 1
        %s312 = scalar_lea.sflag [#allocation3], %s311
        %s313 = sand.u32 %s59, 1
        %s314 = smul.addr %s313, 16
        %s315 = scalar_lea.vmem [#allocation2], %s314
        %p316 = pneg %p72
        %p317 = pneg %p69
        %s318 = sand.u32 %s28, 1
        %s319 = scalar_lea.sflag [#allocation6], %s318
        %s320 = sand.u32 %s87, 1
        %s321 = smul.addr %s320, 16
        %s322 = scalar_lea.vmem [#allocation5], %s321
        %p323 = pneg %p100
        %p324 = pneg %p97
        %s325 = sand.u32 %s28, 1
        %s326 = scalar_lea.sflag [#allocation6], %s325
        %s327 = sand.u32 %s115, 1
        %s328 = smul.addr %s327, 16
        %s329 = scalar_lea.vmem [#allocation7], %s328
        %p330 = pneg %p128
        %p331 = pneg %p125
        %p332 = pneg %p158
        %p333 = pneg %p155
        %s334 = sand.u32 %s145, 1
        %s335 = scalar_lea.sflag [#allocation4], %s334
        %s336 = sand.u32 %s145, 1
        %s337 = smul.addr %s336, 16
        %s338 = scalar_lea.vmem [#allocation8], %s337
        %p339 = pneg %p188
        %p340 = pneg %p185
        %s341 = sand.u32 %s175, 1
        %s342 = scalar_lea.sflag [#allocation10], %s341
        %s343 = sand.u32 %s175, 1
        %s344 = smul.addr %s343, 16
        %s345 = scalar_lea.vmem [#allocation9], %s344
        %s346 = smul.u32 2, %s34
        %s347 = smul.u32 2, %s34
        %s348 = smul.u32 2, %s34
        %s349 = smul.u32 2, %s34
        %s350 = smul.u32 2, %s34
        %v351 = vld [vmem:[%s288] sm:$0xff]
        %v352 = vld [vmem:[%s288 + $0x8] sm:$0xff]
        %v353 = vld [vmem:[%s297] sm:$0xff]
        %v354 = vld [vmem:[%s297 + $0x8] sm:$0xff]
        %v355 = vld [vmem:[%s306] sm:$0xff]
        %v356 = vld [vmem:[%s306 + $0x8] sm:$0xff]
        %vm357 = vcmask 261120
        %v359 = vsel %vm357, %v351, 0
        %v362 = vsel %vm357, %v353, 0
        %364 = vmatprep.subr.mxu0 0.0
        %365 = vmatpush1.xpose.msra.mxu0 %v362
        %366 = vmatprep.subr.mxu0 0.0
        %367 = vmatpush1.xpose.msra.mxu0 0.0
        %368 = vmatprep.subr.mxu0 0.0
        %369 = vmatpush1.xpose.msra.mxu0 0.0
        %370 = vmatprep.subr.mxu0 0.0
        %371 = vmatpush1.xpose.msra.mxu0 0.0
        %372 = vmatprep.subr.mxu0 0.0
        %373 = vmatpush1.xpose.msra.mxu0 0.0
        %374 = vmatprep.subr.mxu0 0.0
        %375 = vmatpush1.xpose.msra.mxu0 0.0
        %376 = vmatprep.subr.mxu0 0.0
        %377 = vmatpush1.xpose.msra.mxu0 0.0
        %378 = vmatprep.subr.mxu0 0.0
        %379 = vmatpush1.xpose.msra.mxu0 0.0
        %380 = vmatprep.subr.mxu0 0.0
        %381 = vmatpush1.xpose.msra.mxu0 0.0
        %382 = vmatprep.subr.mxu0 0.0
        %383 = vmatpush1.xpose.msra.mxu0 0.0
        %384 = vmatprep.subr.mxu0 0.0
        %385 = vmatpush1.xpose.msra.mxu0 0.0
        %386 = vmatprep.subr.mxu0 0.0
        %387 = vmatpush1.xpose.msra.mxu0 0.0
        %388 = vmatprep.subr.mxu0 0.0
        %389 = vmatpush1.xpose.msra.mxu0 0.0
        %390 = vmatprep.subr.mxu0 0.0
        %391 = vmatpush1.xpose.msra.mxu0 0.0
        %392 = vmatprep.subr.mxu0 0.0
        %393 = vmatpush1.xpose.msra.mxu0 0.0
        %394 = vmatprep.subr.mxu0 0.0
        %395 = vmatpush1.xpose.msra.mxu0 0.0
        %396 = vmatprep.subr.mxu0 0.0
        %397 = vmatpush1.xpose.msra.mxu0 0.0
        %398 = vmatprep.subr.mxu0 0.0
        %399 = vmatpush1.xpose.msra.mxu0 0.0
        %400 = vmatprep.subr.mxu0 0.0
        %401 = vmatpush1.xpose.msra.mxu0 0.0
        %402 = vmatprep.subr.mxu0 0.0
        %403 = vmatpush1.xpose.msra.mxu0 0.0
        %404 = vmatprep.subr.mxu0 0.0
        %405 = vmatpush1.xpose.msra.mxu0 0.0
        %406 = vmatprep.subr.mxu0 0.0
        %407 = vmatpush1.xpose.msra.mxu0 0.0
        %408 = vmatprep.subr.mxu0 0.0
        %409 = vmatpush1.xpose.msra.mxu0 0.0
        %410 = vmatprep.subr.mxu0 0.0
        %411 = vmatpush1.xpose.msra.mxu0 0.0
        %412 = vmatprep.subr.mxu0 0.0
        %413 = vmatpush1.xpose.msra.mxu0 0.0
        %414 = vmatprep.subr.mxu0 0.0
        %415 = vmatpush1.xpose.msra.mxu0 0.0
        %416 = vmatprep.subr.mxu0 0.0
        %417 = vmatpush1.xpose.msra.mxu0 0.0
        %418 = vmatprep.subr.mxu0 0.0
        %419 = vmatpush1.xpose.msra.mxu0 0.0
        %420 = vmatprep.subr.mxu0 0.0
        %421 = vmatpush1.xpose.msra.mxu0 0.0
        %422 = vmatprep.subr.mxu0 0.0
        %423 = vmatpush1.xpose.msra.mxu0 0.0
        %424 = vmatprep.subr.mxu0 0.0
        %425 = vmatpush1.xpose.msra.mxu0 0.0
        %426 = vmatprep.subr.mxu0 0.0
        %427 = vmatpush1.xpose.msra.mxu0 0.0
        %428 = vmatprep.mubr.f32.mxu0 0.0
        %429 = vmatmul.mubr.f32.gmra.mrb[0].mxu0 %v359
        %v430 = vpop.f32.mrb[0].mxu0
        %v431 = vadd.f32 0.0, %v430
        %v432 = vpop.f32.mrb[0].mxu0
        %433 = vdwg.mxu0
        %v435 = vsel %vm357, %v352, 0
        %v438 = vsel %vm357, %v354, 0
        %440 = vmatprep.subr.mxu0 0.0
        %441 = vmatpush1.xpose.msra.mxu0 %v438
        %442 = vmatprep.subr.mxu0 0.0
        %443 = vmatpush1.xpose.msra.mxu0 0.0
        %444 = vmatprep.subr.mxu0 0.0
        %445 = vmatpush1.xpose.msra.mxu0 0.0
        %446 = vmatprep.subr.mxu0 0.0
        %447 = vmatpush1.xpose.msra.mxu0 0.0
        %448 = vmatprep.subr.mxu0 0.0
        %449 = vmatpush1.xpose.msra.mxu0 0.0
        %450 = vmatprep.subr.mxu0 0.0
        %451 = vmatpush1.xpose.msra.mxu0 0.0
        %452 = vmatprep.subr.mxu0 0.0
        %453 = vmatpush1.xpose.msra.mxu0 0.0
        %454 = vmatprep.subr.mxu0 0.0
        %455 = vmatpush1.xpose.msra.mxu0 0.0
        %456 = vmatprep.subr.mxu0 0.0
        %457 = vmatpush1.xpose.msra.mxu0 0.0
        %458 = vmatprep.subr.mxu0 0.0
        %459 = vmatpush1.xpose.msra.mxu0 0.0
        %460 = vmatprep.subr.mxu0 0.0
        %461 = vmatpush1.xpose.msra.mxu0 0.0
        %462 = vmatprep.subr.mxu0 0.0
        %463 = vmatpush1.xpose.msra.mxu0 0.0
        %464 = vmatprep.subr.mxu0 0.0
        %465 = vmatpush1.xpose.msra.mxu0 0.0
        %466 = vmatprep.subr.mxu0 0.0
        %467 = vmatpush1.xpose.msra.mxu0 0.0
        %468 = vmatprep.subr.mxu0 0.0
        %469 = vmatpush1.xpose.msra.mxu0 0.0
        %470 = vmatprep.subr.mxu0 0.0
        %471 = vmatpush1.xpose.msra.mxu0 0.0
        %472 = vmatprep.subr.mxu0 0.0
        %473 = vmatpush1.xpose.msra.mxu0 0.0
        %474 = vmatprep.subr.mxu0 0.0
        %475 = vmatpush1.xpose.msra.mxu0 0.0
        %476 = vmatprep.subr.mxu0 0.0
        %477 = vmatpush1.xpose.msra.mxu0 0.0
        %478 = vmatprep.subr.mxu0 0.0
        %479 = vmatpush1.xpose.msra.mxu0 0.0
        %480 = vmatprep.subr.mxu0 0.0
        %481 = vmatpush1.xpose.msra.mxu0 0.0
        %482 = vmatprep.subr.mxu0 0.0
        %483 = vmatpush1.xpose.msra.mxu0 0.0
        %484 = vmatprep.subr.mxu0 0.0
        %485 = vmatpush1.xpose.msra.mxu0 0.0
        %486 = vmatprep.subr.mxu0 0.0
        %487 = vmatpush1.xpose.msra.mxu0 0.0
        %488 = vmatprep.subr.mxu0 0.0
        %489 = vmatpush1.xpose.msra.mxu0 0.0
        %490 = vmatprep.subr.mxu0 0.0
        %491 = vmatpush1.xpose.msra.mxu0 0.0
        %492 = vmatprep.subr.mxu0 0.0
        %493 = vmatpush1.xpose.msra.mxu0 0.0
        %494 = vmatprep.subr.mxu0 0.0
        %495 = vmatpush1.xpose.msra.mxu0 0.0
        %496 = vmatprep.subr.mxu0 0.0
        %497 = vmatpush1.xpose.msra.mxu0 0.0
        %498 = vmatprep.subr.mxu0 0.0
        %499 = vmatpush1.xpose.msra.mxu0 0.0
        %500 = vmatprep.subr.mxu0 0.0
        %501 = vmatpush1.xpose.msra.mxu0 0.0
        %502 = vmatprep.subr.mxu0 0.0
        %503 = vmatpush1.xpose.msra.mxu0 0.0
        %504 = vmatprep.mubr.f32.mxu0 0.0
        %505 = vmatmul.mubr.f32.gmra.mrb[0].mxu0 %v435
        %v506 = vpop.f32.mrb[0].mxu0
        %v507 = vadd.f32 0.0, %v506
        %v508 = vpop.f32.mrb[0].mxu0
        %509 = vdwg.mxu0
        %v510 = vmul.f32 %v431, 0.17677669
        %v511 = vmul.f32 %v507, 0.17677669
        %vm512 = vcmask 64512
        %v513 = vsel %vm512, %v510, -inf
        %514 = vmax.xlane.f32.xlu0 %v513
        %v515 = vpop.xlane.xlu0 %514
        %v516 = vsel %vm512, %v511, -inf
        %517 = vmax.xlane.f32.xlu0 %v516
        %v518 = vpop.xlane.xlu0 %517
        %v519 = vsub.f32 %v510, %v515
        %v520 = vsub.f32 %v511, %v518
        %v521 = vmul.f32 %v519, 1.442695
        %v522 = vpow.pop %v521
        %v523 = vmul.f32 %v520, 1.442695
        %v524 = vpow.pop %v523
        %v525 = vsel %vm512, %v522, 0.0
        %526 = vadd.xlane.f32.xlu0 %v525
        %v527 = vpop.xlane.xlu0 %526
        %v528 = vsel %vm512, %v524, 0.0
        %529 = vadd.xlane.f32.xlu0 %v528
        %v530 = vpop.xlane.xlu0 %529
        %v531 = vrcp.pop %v527
        %v532 = vrcp.pop %v530
        %v533 = vmul.f32 %v522, %v531
        %v534 = vmul.f32 %v524, %v532
        %535 = vst.msk [vmem:[%s345] sm:$0xff] %vm512, %v533
        %536 = vst.msk [vmem:[%s345 + $0x8] sm:$0xff] %vm512, %v534
        %v538 = vsel %vm512, %v533, 0
        %540 = vmatprep.subr.mxu0 0.0
        %541 = vmatpush1.msra.mxu0 %v355
        %542 = vmatprep.subr.mxu0 0.0
        %543 = vmatpush1.msra.mxu0 0.0
        %544 = vmatprep.subr.mxu0 0.0
        %545 = vmatpush1.msra.mxu0 0.0
        %546 = vmatprep.subr.mxu0 0.0
        %547 = vmatpush1.msra.mxu0 0.0
        %548 = vmatprep.subr.mxu0 0.0
        %549 = vmatpush1.msra.mxu0 0.0
        %550 = vmatprep.subr.mxu0 0.0
        %551 = vmatpush1.msra.mxu0 0.0
        %552 = vmatprep.subr.mxu0 0.0
        %553 = vmatpush1.msra.mxu0 0.0
        %554 = vmatprep.subr.mxu0 0.0
        %555 = vmatpush1.msra.mxu0 0.0
        %556 = vmatprep.subr.mxu0 0.0
        %557 = vmatpush1.msra.mxu0 0.0
        %558 = vmatprep.subr.mxu0 0.0
        %559 = vmatpush1.msra.mxu0 0.0
        %560 = vmatprep.subr.mxu0 0.0
        %561 = vmatpush1.msra.mxu0 0.0
        %562 = vmatprep.subr.mxu0 0.0
        %563 = vmatpush1.msra.mxu0 0.0
        %564 = vmatprep.subr.mxu0 0.0
        %565 = vmatpush1.msra.mxu0 0.0
        %566 = vmatprep.subr.mxu0 0.0
        %567 = vmatpush1.msra.mxu0 0.0
        %568 = vmatprep.subr.mxu0 0.0
        %569 = vmatpush1.msra.mxu0 0.0
        %570 = vmatprep.subr.mxu0 0.0
        %571 = vmatpush1.msra.mxu0 0.0
        %572 = vmatprep.subr.mxu0 0.0
        %573 = vmatpush1.msra.mxu0 0.0
        %574 = vmatprep.subr.mxu0 0.0
        %575 = vmatpush1.msra.mxu0 0.0
        %576 = vmatprep.subr.mxu0 0.0
        %577 = vmatpush1.msra.mxu0 0.0
        %578 = vmatprep.subr.mxu0 0.0
        %579 = vmatpush1.msra.mxu0 0.0
        %580 = vmatprep.subr.mxu0 0.0
        %581 = vmatpush1.msra.mxu0 0.0
        %582 = vmatprep.subr.mxu0 0.0
        %583 = vmatpush1.msra.mxu0 0.0
        %584 = vmatprep.subr.mxu0 0.0
        %585 = vmatpush1.msra.mxu0 0.0
        %586 = vmatprep.subr.mxu0 0.0
        %587 = vmatpush1.msra.mxu0 0.0
        %588 = vmatprep.subr.mxu0 0.0
        %589 = vmatpush1.msra.mxu0 0.0
        %590 = vmatprep.subr.mxu0 0.0
        %591 = vmatpush1.msra.mxu0 0.0
        %592 = vmatprep.subr.mxu0 0.0
        %593 = vmatpush1.msra.mxu0 0.0
        %594 = vmatprep.subr.mxu0 0.0
        %595 = vmatpush1.msra.mxu0 0.0
        %596 = vmatprep.subr.mxu0 0.0
        %597 = vmatpush1.msra.mxu0 0.0
        %598 = vmatprep.subr.mxu0 0.0
        %599 = vmatpush1.msra.mxu0 0.0
        %600 = vmatprep.subr.mxu0 0.0
        %601 = vmatpush1.msra.mxu0 0.0
        %602 = vmatprep.subr.mxu0 0.0
        %603 = vmatpush1.msra.mxu0 0.0
        %604 = vmatprep.mubr.f32.mxu0 0.0
        %605 = vmatmul.mubr.f32.gmra.mrb[0].mxu0 %v538
        %v606 = vpop.f32.mrb[0].mxu0
        %v607 = vadd.f32 0.0, %v606
        %v608 = vpop.f32.mrb[0].mxu0
        %609 = vdwg.mxu0
        %v611 = vsel %vm512, %v534, 0
        %613 = vmatprep.subr.mxu0 0.0
        %614 = vmatpush1.msra.mxu0 %v356
        %615 = vmatprep.subr.mxu0 0.0
        %616 = vmatpush1.msra.mxu0 0.0
        %617 = vmatprep.subr.mxu0 0.0
        %618 = vmatpush1.msra.mxu0 0.0
        %619 = vmatprep.subr.mxu0 0.0
        %620 = vmatpush1.msra.mxu0 0.0
        %621 = vmatprep.subr.mxu0 0.0
        %622 = vmatpush1.msra.mxu0 0.0
        %623 = vmatprep.subr.mxu0 0.0
        %624 = vmatpush1.msra.mxu0 0.0
        %625 = vmatprep.subr.mxu0 0.0
        %626 = vmatpush1.msra.mxu0 0.0
        %627 = vmatprep.subr.mxu0 0.0
        %628 = vmatpush1.msra.mxu0 0.0
        %629 = vmatprep.subr.mxu0 0.0
        %630 = vmatpush1.msra.mxu0 0.0
        %631 = vmatprep.subr.mxu0 0.0
        %632 = vmatpush1.msra.mxu0 0.0
        %633 = vmatprep.subr.mxu0 0.0
        %634 = vmatpush1.msra.mxu0 0.0
        %635 = vmatprep.subr.mxu0 0.0
        %636 = vmatpush1.msra.mxu0 0.0
        %637 = vmatprep.subr.mxu0 0.0
        %638 = vmatpush1.msra.mxu0 0.0
        %639 = vmatprep.subr.mxu0 0.0
        %640 = vmatpush1.msra.mxu0 0.0
        %641 = vmatprep.subr.mxu0 0.0
        %642 = vmatpush1.msra.mxu0 0.0
        %643 = vmatprep.subr.mxu0 0.0
        %644 = vmatpush1.msra.mxu0 0.0
        %645 = vmatprep.subr.mxu0 0.0
        %646 = vmatpush1.msra.mxu0 0.0
        %647 = vmatprep.subr.mxu0 0.0
        %648 = vmatpush1.msra.mxu0 0.0
        %649 = vmatprep.subr.mxu0 0.0
        %650 = vmatpush1.msra.mxu0 0.0
        %651 = vmatprep.subr.mxu0 0.0
        %652 = vmatpush1.msra.mxu0 0.0
        %653 = vmatprep.subr.mxu0 0.0
        %654 = vmatpush1.msra.mxu0 0.0
        %655 = vmatprep.subr.mxu0 0.0
        %656 = vmatpush1.msra.mxu0 0.0
        %657 = vmatprep.subr.mxu0 0.0
        %658 = vmatpush1.msra.mxu0 0.0
        %659 = vmatprep.subr.mxu0 0.0
        %660 = vmatpush1.msra.mxu0 0.0
        %661 = vmatprep.subr.mxu0 0.0
        %662 = vmatpush1.msra.mxu0 0.0
        %663 = vmatprep.subr.mxu0 0.0
        %664 = vmatpush1.msra.mxu0 0.0
        %665 = vmatprep.subr.mxu0 0.0
        %666 = vmatpush1.msra.mxu0 0.0
        %667 = vmatprep.subr.mxu0 0.0
        %668 = vmatpush1.msra.mxu0 0.0
        %669 = vmatprep.subr.mxu0 0.0
        %670 = vmatpush1.msra.mxu0 0.0
        %671 = vmatprep.subr.mxu0 0.0
        %672 = vmatpush1.msra.mxu0 0.0
        %673 = vmatprep.subr.mxu0 0.0
        %674 = vmatpush1.msra.mxu0 0.0
        %675 = vmatprep.subr.mxu0 0.0
        %676 = vmatpush1.msra.mxu0 0.0
        %677 = vmatprep.mubr.f32.mxu0 0.0
        %678 = vmatmul.mubr.f32.gmra.mrb[0].mxu0 %v611
        %v679 = vpop.f32.mrb[0].mxu0
        %v680 = vadd.f32 0.0, %v679
        %v681 = vpop.f32.mrb[0].mxu0
        %682 = vdwg.mxu0
        %683 = vst.msk [vmem:[%s338] sm:$0xff] %vm357, %v607
        %684 = vst.msk [vmem:[%s338 + $0x8] sm:$0xff] %vm357, %v680
        %s685 = sand.u32 %s145, 1
        %s686 = scalar_lea.sflag [#allocation4], %s685
        %s687 = sand.u32 %s145, 1
        %s688 = smul.addr %s687, 16
        %s689 = scalar_lea.vmem [#allocation8], %s688
        %s690 = sand.u32 %s175, 1
        %s691 = scalar_lea.sflag [#allocation10], %s690
        %s692 = sand.u32 %s175, 1
        %s693 = smul.addr %s692, 16
        %s694 = scalar_lea.vmem [#allocation9], %s693
        // Predicated region
        $region45: #{tpu_custom_call.1} parent=31 // pred_check
          %p695 = pneg %p155
        $region46: #{tpu_custom_call.1} parent=31 // pred_check_branch
          %697 = sbr.rel (%p695) target = $region48
        $region47: #{tpu_custom_call.1} parent=31 // pred_region
          %s698 = smul.u32 2, %s34
          %s700 = ssub.s32 256, 256
          %701 = vsyncadd %s686, %s700
          %s702 = sadd.s32 %s35, %s698
          %s703 = smul.addr %s33, 2
          %s704 = sadd.s32 %s702, %s703
          %s705 = smul.addr %s704, 128
          %s706 = scalar_lea.hbm %s3, %s705
          %s707 = sshll.u32 %s689, 4
          %s708 = int_to_ptr.vmem [resolvable:$true] %s707
          %713 = dma.vmem_to_hbm [thread:$0]  %s708, 256, %s706, %s686, 128, 128, 8
        $region48: #{tpu_custom_call.1} parent=31 // pred_fallthru
          _
        // Predicated region
        $region49: #{tpu_custom_call.1} parent=31 // pred_check
          %p714 = pneg %p185
        $region50: #{tpu_custom_call.1} parent=31 // pred_check_branch
          %716 = sbr.rel (%p714) target = $region52
        $region51: #{tpu_custom_call.1} parent=31 // pred_region
          %s717 = smul.u32 2, %s34
          %s719 = ssub.s32 256, 256
          %720 = vsyncadd %s691, %s719
          %s721 = sadd.s32 %s35, %s717
          %s722 = smul.addr %s33, 2
          %s723 = sadd.s32 %s721, %s722
          %s724 = smul.addr %s723, 128
          %s725 = scalar_lea.hbm %s4, %s724
          %s726 = sshll.u32 %s694, 4
          %s727 = int_to_ptr.vmem [resolvable:$true] %s726
          %732 = dma.vmem_to_hbm [thread:$0]  %s727, 256, %s725, %s691, 128, 128, 8
        $region52: #{tpu_custom_call.1} parent=31 // pred_fallthru
          _
      $region32: #{tpu_custom_call.1} parent=5 // pred_fallthru
        _
      %p733 = scmp.le.s32.totalorder 2, %s23
      // Predicated region
      $region53: #{tpu_custom_call.1} parent=5 // pred_check
        %p734 = pneg %p733
      $region54: #{tpu_custom_call.1} parent=5 // pred_check_branch
        %736 = sbr.rel (%p734) target = $region56
      $region55: #{tpu_custom_call.1} parent=5 // pred_region
        %s737 = ssub.s32 %s23, 2
        // Predicated region
        $region57: #{tpu_custom_call.1} parent=55 // pred_check
          %p738 = pneg %p161
        $region58: #{tpu_custom_call.1} parent=55 // pred_check_branch
          %740 = sbr.rel (%p738) target = $region60
        $region59: #{tpu_custom_call.1} parent=55 // pred_region
          %s741 = sand.u32 %s146, 1
          %s742 = scalar_lea.sflag [#allocation4], %s741
          %s743 = sand.u32 %s146, 1
          %s744 = smul.addr %s743, 16
          %s745 = scalar_lea.vmem [#allocation8], %s744
          %746 = dma.done %s742, 256
        $region60: #{tpu_custom_call.1} parent=55 // pred_fallthru
          _
        // Predicated region
        $region61: #{tpu_custom_call.1} parent=55 // pred_check
          %p747 = pneg %p191
        $region62: #{tpu_custom_call.1} parent=55 // pred_check_branch
          %749 = sbr.rel (%p747) target = $region64
        $region63: #{tpu_custom_call.1} parent=55 // pred_region
          %s750 = sand.u32 %s176, 1
          %s751 = scalar_lea.sflag [#allocation10], %s750
          %s752 = sand.u32 %s176, 1
          %s753 = smul.addr %s752, 16
          %s754 = scalar_lea.vmem [#allocation9], %s753
          %755 = dma.done %s751, 256
        $region64: #{tpu_custom_call.1} parent=55 // pred_fallthru
          _
      $region56: #{tpu_custom_call.1} parent=5 // pred_fallthru
        _
    $region6: #{tpu_custom_call.1} parent=1 // loop_footer
      %s27 = sadd.s32 1, %s23
    $region7: #{tpu_custom_call.1} parent=1 // loop_footer_branch
      %22 = sbr.rel target = $region3
    $region8: #{tpu_custom_call.1} parent=1 // loop_exit
      _
    %756 = vsyncpa [#allocation3], 1
    %s757 = scalar_lea.sflag [#allocation3], 1
    %758 = vsyncpa %s757, 1
    %759 = vsyncpa [#allocation6], 1
    %s760 = scalar_lea.sflag [#allocation6], 1
    %761 = vsyncpa %s760, 1
    %762 = vsyncpa [#allocation4], 1
    %s763 = scalar_lea.sflag [#allocation4], 1
    %764 = vsyncpa %s763, 1
    %765 = vsyncpa [#allocation10], 1
    %s766 = scalar_lea.sflag [#allocation10], 1
    %767 = vsyncpa %s766, 1

</llo_original>
